<compile_context>
chip_gen: v5e
topology: v5e:2x2
jax: 0.10.0
libtpu: 0.0.40
codegen_flags: <defaults>
</compile_context>

<pallas_src>
import functools
import math

import jax
import jax.numpy as jnp
import numpy as np
from jax.experimental import pallas as pl
from jax.experimental.pallas import tpu as pltpu


def _round_up(x, m):
    return (x + m - 1) // m * m


def _ge2e_kernel(x_ref, row_ref, scal_ref, norm_ref, loss_ref, *, emb_size):
    x = x_ref[...]                              # [TB, E_pad] f32 (zero-padded lanes)
    row = row_ref[...]                          # [TB, 4]: S_self, n_self, valid, sgn_self

    S_self = row[:, 0:1]                        # [TB, 1] scalar sum of own speaker block
    n_self = row[:, 1:2]                        # [TB, 1] own group size (>= 1)
    valid = row[:, 2:3]                         # [TB, 1] 1.0 for real rows, 0.0 for padding
    sgn_self = row[:, 3:4]                      # [TB, 1] sign of own scalar centroid

    # SMEM scalars (precomputed in wrapper): relu(w), b, class-sign counts, exp(b).
    w = scal_ref[0]
    b = scal_ref[1]
    n_pos = scal_ref[2]
    n_neg = scal_ref[3]
    n_zero = scal_ref[4]
    exp_b = scal_ref[5]

    eps = jnp.float32(1e-8)
    e_f = jnp.float32(emb_size)                 # true (unpadded) embedding size
    sqrt_e = jnp.float32(math.sqrt(emb_size))

    # --- per-row reductions (hot path) ---
    row_sum = jnp.sum(x, axis=1, keepdims=True)          # [TB, 1]
    row_sq = jnp.sum(x * x, axis=1, keepdims=True)       # [TB, 1]
    norm_e = jnp.sqrt(row_sq)

    # F.normalize(inputs, p=2, dim=1): x / max(||x||, 1e-12) == x * rsqrt(max(||x||^2, 1e-24))
    norm_ref[...] = (x * jax.lax.rsqrt(jnp.maximum(row_sq, jnp.float32(1e-24)))
                     ).astype(norm_ref.dtype)

    # --- self similarity: centroid_minus_self[d] = (S_j - e[d]) / n_j (vector) ---
    inv_n = 1.0 / n_self                        # exact: narrow [TB,1], feeds cm_sq twice
    dot_self = (S_self * row_sum - row_sq) * inv_n
    cm_sq = (e_f * S_self * S_self - 2.0 * S_self * row_sum + row_sq) * (inv_n * inv_n)
    norm_cm = jnp.sqrt(jnp.maximum(cm_sq, 0.0))
    cos_self = dot_self / jnp.maximum(norm_e * norm_cm, eps)
    sim_self = w * cos_self + b                           # [TB, 1]

    # --- "other speaker" terms collapsed to per-row scalars ---
    # cos(e, c_k*ones) = sign(c_k) * r with r = sum(e) / (||e|| * sqrt(E)).
    r = row_sum / jnp.maximum(norm_e * sqrt_e, eps)       # [TB, 1]
    exp_pos = jnp.exp(w * r + b)
    exp_neg = jnp.exp(-w * r + b)
    sum_all = n_pos * exp_pos + n_neg * exp_neg + n_zero * exp_b
    # sum_all counted the self class with its scalar centroid; swap that term for sim_self.
    self_as_other = jnp.where(sgn_self > 0.0, exp_pos,
                              jnp.where(sgn_self < 0.0, exp_neg, exp_b))
    summation = sum_all - self_as_other + jnp.exp(sim_self)

    # softmax-GE2E per-row loss; padded rows masked out via `valid`.
    loss_ref[...] = (-sim_self + jnp.log(summation)) * valid


def ge2e_loss(inputs, targets, w, b, n_classes, *, block_rows=2048,
              normalized_dtype=jnp.float32):
    """Pallas GE2E forward. inputs: [B, E] float, targets: [B] int in [0, n_classes)."""
    B, E = inputs.shape
    x = inputs.astype(jnp.float32)
    tgt = targets.astype(jnp.int32)

    # ---- hoisted per-class statistics (tiny XLA ops; removes cross-batch dep) ----
    # One unavoidable wrapper pass over x: per-row sums feed the per-class scalar sums.
    row_sum_b = jnp.sum(x, axis=1)                                        # [B]
    S_k = jax.ops.segment_sum(row_sum_b, tgt, num_segments=n_classes)     # [C] scalar block sums
    n_k = jax.ops.segment_sum(jnp.ones((B,), jnp.float32), tgt,
                              num_segments=n_classes)                     # [C] group sizes
    present = n_k > 0.0
    c_k = jnp.where(present, S_k / jnp.maximum(n_k, 1.0), 0.0)            # [C] scalar centroids

    # Class-sign counters: the entire "other speaker" sum collapses to these 3 scalars.
    n_pos = jnp.sum(jnp.where(present & (c_k > 0.0), 1.0, 0.0))
    n_neg = jnp.sum(jnp.where(present & (c_k < 0.0), 1.0, 0.0))
    n_zero = jnp.sum(jnp.where(present & (c_k == 0.0), 1.0, 0.0))

    S_self = jnp.take(S_k, tgt)                                           # [B]
    n_self = jnp.take(n_k, tgt)                                           # [B] (>= 1 for valid labels)
    sgn_self = jnp.sign(jnp.take(c_k, tgt))                               # [B]

    # relu(w) — semantically identical to F.relu(self.w) inside the forward pass.
    w_relu = jnp.maximum(jnp.asarray(w, jnp.float32).reshape(()), 0.0)
    b_s = jnp.asarray(b, jnp.float32).reshape(())
    scal = jnp.stack([w_relu, b_s, n_pos, n_neg, n_zero, jnp.exp(b_s)])   # (6,) -> SMEM

    # ---- lane-dense layout & batch tiling ----
    E_pad = _round_up(E, 128)
    TB = _round_up(min(block_rows, _round_up(B, 8)), 8)
    # In-flight VMEM (double-buffered input+output tiles) capped at ~24 MiB:
    # 16 * TB * E_pad bytes <= 24 MiB  ->  2-6 MiB per tile, ~85%+ of HBM roofline.
    rows_budget = max(8, (((24 * 1024 * 1024) // (16 * E_pad)) // 8) * 8)
    TB = max(8, min(TB, rows_budget))
    if B > 8:
        # Keep >= 2 grid steps so the "parallel" axis shards across v7x's 2 TensorCores.
        TB = min(TB, max(8, _round_up((B + 1) // 2, 8)))
    B_pad = _round_up(B, TB)
    G = B_pad // TB

    # Skip the extra HBM pad/slice passes when the input is already tile-aligned.
    needs_pad = (E_pad != E) or (B_pad != B)
    x_in = jnp.pad(x, ((0, B_pad - B), (0, E_pad - E))) if needs_pad else x

    S_self_p = jnp.zeros((B_pad,), jnp.float32).at[:B].set(S_self)
    n_self_p = jnp.ones((B_pad,), jnp.float32).at[:B].set(n_self)   # pad rows: n=1 (no div-by-0)
    valid_p = jnp.zeros((B_pad,), jnp.float32).at[:B].set(1.0)
    sgn_self_p = jnp.zeros((B_pad,), jnp.float32).at[:B].set(sgn_self)
    row_stats = jnp.stack([S_self_p, n_self_p, valid_p, sgn_self_p], axis=1)   # [B_pad, 4]

    kernel = functools.partial(_ge2e_kernel, emb_size=E)

    normalized_pad, loss_rows = pl.pallas_call(
        kernel,
        grid=(G,),
        in_specs=[
            pl.BlockSpec((TB, E_pad), lambda i: (i, 0)),          # embeddings tile
            pl.BlockSpec((TB, 4), lambda i: (i, 0)),              # per-row self stats
            pl.BlockSpec(memory_space=pltpu.MemorySpace.SMEM),    # scalar params/counters
        ],
        out_specs=(
            pl.BlockSpec((TB, E_pad), lambda i: (i, 0)),          # normalized embeddings
            pl.BlockSpec((TB, 1), lambda i: (i, 0)),              # per-row loss partials
        ),
        out_shape=(
            jax.ShapeDtypeStruct((B_pad, E_pad), normalized_dtype),
            jax.ShapeDtypeStruct((B_pad, 1), jnp.float32),
        ),
        compiler_params=pltpu.CompilerParams(
            dimension_semantics=("parallel",),
            vmem_limit_bytes=48 * 1024 * 1024),
    )(x_in, row_stats, scal)

    loss = jnp.sum(loss_rows)
    normalized = normalized_pad[:B, :E] if needs_pad else normalized_pad
    # Mirrors the torch module's return signature: (normalized, None, loss)
    return normalized, None, loss


def _reference_numpy(x, t, w, b):
    """Faithful numpy re-implementation of the PyTorch loops (float64)."""
    eps = 1e-8
    x = np.asarray(x, np.float64)
    t = np.asarray(t)
    w = max(float(w), 0.0)
    b = float(b)
    speakers = sorted(set(t.tolist()))
    groups = {s: x[t == s] for s in speakers}

    def cos(a, bvec):
        na = np.linalg.norm(a)
        nb = np.linalg.norm(bvec)
        return float(np.dot(a, bvec) / max(na * nb, eps))

    loss = 0.0
    for s in speakers:
        for e in groups[s]:
            S = groups[s].sum()                  # scalar sum over the whole block
            n = groups[s].shape[0]
            cm = (S - e) / n                     # vector
            self_sim = w * cos(e, cm) + b
            summ = 0.0
            for o in speakers:
                if o == s:
                    sim = self_sim
                else:
                    c = groups[o].sum() / groups[o].shape[0]   # scalar centroid
                    sim = w * cos(e, np.full_like(e, c)) + b
                summ += np.exp(sim)
            loss += -self_sim + np.log(summ)
    norm = x / np.maximum(np.linalg.norm(x, axis=1, keepdims=True), 1e-12)
    return norm, loss


if __name__ == "__main__":
    B, E, C = 16, 32, 4   # batch of utterances, embedding size, n_classes (speakers)

    key = jax.random.PRNGKey(0)
    kx, kt = jax.random.split(key)
    inputs = jax.random.normal(kx, (B, E), dtype=jnp.float32)
    targets = jax.random.randint(kt, (B,), 0, C, dtype=jnp.int32)

    # Deterministic parameter init matching the module's __init__.
    w_param = jnp.float32(1.0)
    b_param = jnp.float32(0.0)

    # block_rows=8 -> grid=(2,) even at this tiny size, exercising the tiled/pipelined path.
    normalized, _none, loss = ge2e_loss(inputs, targets, w_param, b_param, C, block_rows=8)
    jax.block_until_ready(normalized)
    jax.block_until_ready(loss)

    # Cross-check against a faithful numpy port of the PyTorch loops.
    ref_norm, ref_loss = _reference_numpy(np.asarray(inputs), np.asarray(targets),
                                          float(w_param), float(b_param))
    np.testing.assert_allclose(np.asarray(normalized), ref_norm, rtol=1e-3, atol=1e-3)
    np.testing.assert_allclose(float(loss), ref_loss, rtol=2e-3, atol=2e-3)

    print("KERNEL_OK")
</pallas_src>

<mosaic_0001>
module attributes {stable_mosaic.version = 11 : i64} {
  func.func @_ge2e_kernel(%arg0: i32, %arg1: memref<8x128xf32, #tpu.memory_space<vmem>>, %arg2: memref<8x4xf32, #tpu.memory_space<vmem>>, %arg3: memref<6xf32, #tpu.memory_space<smem>>, %arg4: memref<8x128xf32, #tpu.memory_space<vmem>>, %arg5: memref<8x1xf32, #tpu.memory_space<vmem>>) attributes {dimension_semantics = [#tpu.dimension_semantics<parallel>], iteration_bounds = array<i64: 2>, scalar_prefetch = 0 : i64, scratch_operands = 0 : i64, tpu.core_type = #tpu.core_type<tc>, window_params = [{transform_indices = @transform_0, window_bounds = array<i64: 8, 128>}, {transform_indices = @transform_1, window_bounds = array<i64: 8, 4>}, {transform_indices = @transform_2, window_bounds = array<i64: 6>}, {transform_indices = @transform_3, window_bounds = array<i64: 8, 128>}, {transform_indices = @transform_4, window_bounds = array<i64: 8, 1>}]} {
    %c0 = arith.constant 0 : index
    %c0_0 = arith.constant 0 : index
    %0 = vector.load %arg1[%c0, %c0_0] : memref<8x128xf32, #tpu.memory_space<vmem>>, vector<8x128xf32>
    %c0_1 = arith.constant 0 : index
    %c0_2 = arith.constant 0 : index
    %1 = vector.load %arg2[%c0_1, %c0_2] : memref<8x4xf32, #tpu.memory_space<vmem>>, vector<8x4xf32>
    %2 = vector.extract_strided_slice %1 {offsets = [0, 0], sizes = [8, 1], strides = [1, 1]} : vector<8x4xf32> to vector<8x1xf32>
    %3 = vector.extract_strided_slice %1 {offsets = [0, 1], sizes = [8, 1], strides = [1, 1]} : vector<8x4xf32> to vector<8x1xf32>
    %4 = vector.extract_strided_slice %1 {offsets = [0, 2], sizes = [8, 1], strides = [1, 1]} : vector<8x4xf32> to vector<8x1xf32>
    %5 = vector.extract_strided_slice %1 {offsets = [0, 3], sizes = [8, 1], strides = [1, 1]} : vector<8x4xf32> to vector<8x1xf32>
    %c0_3 = arith.constant 0 : index
    %6 = memref.load %arg3[%c0_3] : memref<6xf32, #tpu.memory_space<smem>>
    %c1 = arith.constant 1 : index
    %7 = memref.load %arg3[%c1] : memref<6xf32, #tpu.memory_space<smem>>
    %c2 = arith.constant 2 : index
    %8 = memref.load %arg3[%c2] : memref<6xf32, #tpu.memory_space<smem>>
    %c3 = arith.constant 3 : index
    %9 = memref.load %arg3[%c3] : memref<6xf32, #tpu.memory_space<smem>>
    %c4 = arith.constant 4 : index
    %10 = memref.load %arg3[%c4] : memref<6xf32, #tpu.memory_space<smem>>
    %c5 = arith.constant 5 : index
    %11 = memref.load %arg3[%c5] : memref<6xf32, #tpu.memory_space<smem>>
    %cst = arith.constant dense<0.000000e+00> : vector<8xf32>
    %12 = vector.multi_reduction <add>, %0, %cst [1] : vector<8x128xf32> to vector<8xf32>
    %13 = vector.shape_cast %12 : vector<8xf32> to vector<8x1xf32>
    %14 = arith.mulf %0, %0 : vector<8x128xf32>
    %cst_4 = arith.constant dense<0.000000e+00> : vector<8xf32>
    %15 = vector.multi_reduction <add>, %14, %cst_4 [1] : vector<8x128xf32> to vector<8xf32>
    %16 = vector.shape_cast %15 : vector<8xf32> to vector<8x1xf32>
    %17 = math.sqrt %16 : vector<8x1xf32>
    %cst_5 = arith.constant 1.000000e-24 : f32
    %18 = vector.broadcast %cst_5 : f32 to vector<8x1xf32>
    %19 = arith.maximumf %16, %18 : vector<8x1xf32>
    %20 = math.rsqrt %19 : vector<8x1xf32>
    %21 = vector.broadcast %20 : vector<8x1xf32> to vector<8x128xf32>
    %22 = arith.mulf %0, %21 : vector<8x128xf32>
    %c0_6 = arith.constant 0 : index
    %c0_7 = arith.constant 0 : index
    %23 = vector.load %arg4[%c0_6, %c0_7] : memref<8x128xf32, #tpu.memory_space<vmem>>, vector<8x128xf32>
    tpu.vector_store %arg4[%c0_6, %c0_7], %22 {strides = array<i32>} : memref<8x128xf32, #tpu.memory_space<vmem>>, vector<8x128xf32>,
    %cst_8 = arith.constant 1.000000e+00 : f32
    %24 = vector.broadcast %cst_8 : f32 to vector<8x1xf32>
    %25 = arith.divf %24, %3 : vector<8x1xf32>
    %26 = arith.mulf %2, %13 : vector<8x1xf32>
    %27 = arith.subf %26, %16 : vector<8x1xf32>
    %28 = arith.mulf %27, %25 : vector<8x1xf32>
    %cst_9 = arith.constant 3.200000e+01 : f32
    %29 = vector.broadcast %cst_9 : f32 to vector<8x1xf32>
    %30 = arith.mulf %29, %2 : vector<8x1xf32>
    %31 = arith.mulf %30, %2 : vector<8x1xf32>
    %cst_10 = arith.constant 2.000000e+00 : f32
    %32 = vector.broadcast %cst_10 : f32 to vector<8x1xf32>
    %33 = arith.mulf %32, %2 : vector<8x1xf32>
    %34 = arith.mulf %33, %13 : vector<8x1xf32>
    %35 = arith.subf %31, %34 : vector<8x1xf32>
    %36 = arith.addf %35, %16 : vector<8x1xf32>
    %37 = arith.mulf %25, %25 : vector<8x1xf32>
    %38 = arith.mulf %36, %37 : vector<8x1xf32>
    %cst_11 = arith.constant 0.000000e+00 : f32
    %39 = vector.broadcast %cst_11 : f32 to vector<8x1xf32>
    %40 = arith.maximumf %38, %39 : vector<8x1xf32>
    %41 = math.sqrt %40 : vector<8x1xf32>
    %42 = arith.mulf %17, %41 : vector<8x1xf32>
    %cst_12 = arith.constant 9.99999993E-9 : f32
    %43 = vector.broadcast %cst_12 : f32 to vector<8x1xf32>
    %44 = arith.maximumf %42, %43 : vector<8x1xf32>
    %45 = arith.divf %28, %44 : vector<8x1xf32>
    %46 = vector.broadcast %6 : f32 to vector<8x1xf32>
    %47 = arith.mulf %46, %45 : vector<8x1xf32>
    %48 = vector.broadcast %7 : f32 to vector<8x1xf32>
    %49 = arith.addf %47, %48 : vector<8x1xf32>
    %cst_13 = arith.constant 5.65685415 : f32
    %50 = vector.broadcast %cst_13 : f32 to vector<8x1xf32>
    %51 = arith.mulf %17, %50 : vector<8x1xf32>
    %cst_14 = arith.constant 9.99999993E-9 : f32
    %52 = vector.broadcast %cst_14 : f32 to vector<8x1xf32>
    %53 = arith.maximumf %51, %52 : vector<8x1xf32>
    %54 = arith.divf %13, %53 : vector<8x1xf32>
    %55 = vector.broadcast %6 : f32 to vector<8x1xf32>
    %56 = arith.mulf %55, %54 : vector<8x1xf32>
    %57 = vector.broadcast %7 : f32 to vector<8x1xf32>
    %58 = arith.addf %56, %57 : vector<8x1xf32>
    %59 = math.exp %58 : vector<8x1xf32>
    %cst_15 = arith.constant 0.000000e+00 : f32
    %60 = arith.subf %cst_15, %6 : f32
    %61 = vector.broadcast %60 : f32 to vector<8x1xf32>
    %62 = arith.mulf %61, %54 : vector<8x1xf32>
    %63 = vector.broadcast %7 : f32 to vector<8x1xf32>
    %64 = arith.addf %62, %63 : vector<8x1xf32>
    %65 = math.exp %64 : vector<8x1xf32>
    %66 = vector.broadcast %8 : f32 to vector<8x1xf32>
    %67 = arith.mulf %66, %59 : vector<8x1xf32>
    %68 = vector.broadcast %9 : f32 to vector<8x1xf32>
    %69 = arith.mulf %68, %65 : vector<8x1xf32>
    %70 = arith.addf %67, %69 : vector<8x1xf32>
    %71 = arith.mulf %10, %11 : f32
    %72 = vector.broadcast %71 : f32 to vector<8x1xf32>
    %73 = arith.addf %70, %72 : vector<8x1xf32>
    %cst_16 = arith.constant 0.000000e+00 : f32
    %74 = vector.broadcast %cst_16 : f32 to vector<8x1xf32>
    %75 = arith.cmpf ogt, %5, %74 : vector<8x1xf32>
    %cst_17 = arith.constant 0.000000e+00 : f32
    %76 = vector.broadcast %cst_17 : f32 to vector<8x1xf32>
    %77 = arith.cmpf olt, %5, %76 : vector<8x1xf32>
    %78 = vector.broadcast %11 : f32 to vector<8x1xf32>
    %79 = arith.select %77, %65, %78 : vector<8x1xi1>, vector<8x1xf32>
    %80 = arith.select %75, %59, %79 : vector<8x1xi1>, vector<8x1xf32>
    %81 = arith.subf %73, %80 : vector<8x1xf32>
    %82 = math.exp %49 : vector<8x1xf32>
    %83 = arith.addf %81, %82 : vector<8x1xf32>
    %cst_18 = arith.constant 0.000000e+00 : f32
    %84 = vector.broadcast %cst_18 : f32 to vector<8x1xf32>
    %85 = arith.subf %84, %49 : vector<8x1xf32>
    %86 = math.log %83 : vector<8x1xf32>
    %87 = arith.addf %85, %86 : vector<8x1xf32>
    %88 = arith.mulf %87, %4 : vector<8x1xf32>
    %c0_19 = arith.constant 0 : index
    %c0_20 = arith.constant 0 : index
    %89 = vector.load %arg5[%c0_19, %c0_20] : memref<8x1xf32, #tpu.memory_space<vmem>>, vector<8x1xf32>
    tpu.vector_store %arg5[%c0_19, %c0_20], %88 {strides = array<i32>} : memref<8x1xf32, #tpu.memory_space<vmem>>, vector<8x1xf32>,
    return
  }
  func.func @transform_0(%arg0: i32) -> (i32, i32) {
    %c0_i32 = arith.constant 0 : i32
    %c0_i32_0 = arith.constant 0 : i32
    return %arg0, %c0_i32 : i32, i32
  }
  func.func @transform_1(%arg0: i32) -> (i32, i32) {
    %c0_i32 = arith.constant 0 : i32
    %c0_i32_0 = arith.constant 0 : i32
    return %arg0, %c0_i32 : i32, i32
  }
  func.func @transform_2(%arg0: i32) -> i32 {
    %c0_i32 = arith.constant 0 : i32
    %c0_i32_0 = arith.constant 0 : i32
    return %c0_i32 : i32
  }
  func.func @transform_3(%arg0: i32) -> (i32, i32) {
    %c0_i32 = arith.constant 0 : i32
    %c0_i32_0 = arith.constant 0 : i32
    return %arg0, %c0_i32 : i32, i32
  }
  func.func @transform_4(%arg0: i32) -> (i32, i32) {
    %c0_i32 = arith.constant 0 : i32
    %c0_i32_0 = arith.constant 0 : i32
    return %arg0, %c0_i32 : i32, i32
  }
}

</mosaic_0001>

<llo_original>
// kernel: tpu_custom_call.1
$region0: #{tpu_custom_call.1}
  #allocation0 [shape = 'u32[]', space=smem, size = 0x4, offset = 0x4, fixed_abs, tag = 'smem constant byte address 0x4 - core index']
  #allocation1 [shape = 'u32[72,128]{1,0:T(1,128)}', space=vmem, size = 0x9000, scoped, tag = 'internal scratch']
  %s0 = inlined_call_operand.vmem [shape: f32[16,128], index: 0, kind: input, shape index: {}]
  %s1 = inlined_call_operand.vmem [shape: f32[16,4], index: 1, kind: input, shape index: {}]
  %s2 = inlined_call_operand.vmem [shape: f32[6], index: 2, kind: input, shape index: {}]
  %s3 = inlined_call_operand.hbm [shape: f32[16,128], index: 3, kind: output, shape index: {0}]
  %s4 = inlined_call_operand.vmem [shape: f32[16,1], index: 4, kind: output, shape index: {1}]
  %5 = xla_tuple %s3, %s4
  %s6 = sld [smem:[#allocation0]]
  $region57: #{tpu_custom_call.1} parent=0
    _
  %s8 = ssub.s32 1, %s6
  %s9 = scalar_select 0, %s8, %s6
  $region1: #{tpu_custom_call.1} parent=0
    #allocation2 [shape = 'u8[512]{0}', space=smem, size = 0x200, scoped, tag = 'input window, operand 2, single buffered']
    #allocation3 [shape = 's32[2]{0}', space=sflag, size = 0x8, scoped, tag = 'scoped memory for tpu_custom_call.1']
    #allocation4 [shape = 's32[2]{0}', space=sflag, size = 0x8, scoped, tag = 'scoped memory for tpu_custom_call.1']
    #allocation5 [shape = 'u8[8192]{0}', space=vmem, size = 0x2000, scoped, tag = 'output window, operand 0']
    %10 = vsyncpa [#allocation4], 0
    %11 = vsyncpa [#allocation3], 0
    %s12 = scalar_lea.sflag [#allocation3], 1
    %13 = vsyncpa %s12, 0
    loop: start=0, step=1, limit=4
    $region2: #{tpu_custom_call.1} parent=1 // loop_pre_header
      _
    $region3: #{tpu_custom_call.1} parent=1 // loop_header
      %s15 = sphi 0, %s19
      %p16 = scmp.ge.s32.totalorder %s15, 4
      %s25 = sphi 0, %s27
      %s28 = sphi 0, %s25
      %s29 = sphi 0, %s28
      %s45 = sphi 0, %s29
      %s51 = sphi 0, %s53
      %s54 = sphi 0, %s51
      %s55 = sphi 0, %s54
      %s71 = sphi 0, %s55
      %s75 = sphi 0, %s75
      %s77 = sphi 0, %s75
      %s78 = sphi 0, %s77
      %s92 = sphi 0, %s78
      %s98 = sphi 0, %s100
      %s101 = sphi 0, %s98
      %s102 = sphi 0, %s101
      %s118 = sphi 0, %s102
      %s124 = sphi 0, %s126
      %s127 = sphi 0, %s124
      %s128 = sphi 0, %s127
      %s144 = sphi 0, %s128
    $region4: #{tpu_custom_call.1} parent=1 // loop_header_branch
      %18 = sbr.rel (%p16) target = $region8
    $region5: #{tpu_custom_call.1} parent=1 // loop_body
      %s20 = ssub.s32 %s15, 1
      %s21 = ssub.s32 %s15, 2
      %s22 = sadd.s32 %s15, 1
      %s23 = ssub.s32 %s15, %s22
      %p24 = scmp.eq.s32.totalorder %s23, 0
      %s26 = sadd.s32 %s25, 1
      %s27 = scalar_select %p24, %s25, %s26
      %p30 = pneg %p24
      %p31 = scmp.eq.s32.totalorder %s15, 1
      %p32 = por %p30, %p31
      %p33 = scmp.ne.s32.totalorder %s25, %s28
      %p34 = scmp.eq.s32.totalorder %s15, 0
      %p35 = por %p33, %p34
      %p36 = scmp.ne.s32.totalorder %s25, %s28
      %p37 = scmp.eq.s32.totalorder %s20, 1
      %p38 = por %p36, %p37
      %p39 = scmp.ne.s32.totalorder %s28, %s29
      %p40 = scmp.eq.s32.totalorder %s20, 0
      %p41 = por %p39, %p40
      %p42 = scmp.ne.s32.totalorder %s28, %s29
      %p43 = scmp.eq.s32.totalorder %s21, 1
      %p44 = por %p42, %p43
      %p46 = scmp.ne.s32.totalorder %s29, %s45
      %p47 = scmp.eq.s32.totalorder %s21, 0
      %p48 = por %p46, %p47
      %s49 = ssub.s32 %s15, %s22
      %p50 = scmp.eq.s32.totalorder %s49, 0
      %s52 = sadd.s32 %s51, 1
      %s53 = scalar_select %p50, %s51, %s52
      %p56 = pneg %p50
      %p57 = scmp.eq.s32.totalorder %s15, 1
      %p58 = por %p56, %p57
      %p59 = scmp.ne.s32.totalorder %s51, %s54
      %p60 = scmp.eq.s32.totalorder %s15, 0
      %p61 = por %p59, %p60
      %p62 = scmp.ne.s32.totalorder %s51, %s54
      %p63 = scmp.eq.s32.totalorder %s20, 1
      %p64 = por %p62, %p63
      %p65 = scmp.ne.s32.totalorder %s54, %s55
      %p66 = scmp.eq.s32.totalorder %s20, 0
      %p67 = por %p65, %p66
      %p68 = scmp.ne.s32.totalorder %s54, %s55
      %p69 = scmp.eq.s32.totalorder %s21, 1
      %p70 = por %p68, %p69
      %p72 = scmp.ne.s32.totalorder %s55, %s71
      %p73 = scmp.eq.s32.totalorder %s21, 0
      %p74 = por %p72, %p73
      %s76 = sadd.s32 %s75, 1
      %p79 = scmp.eq.s32.totalorder %s15, 1
      %p80 = scmp.ne.s32.totalorder %s75, %s77
      %p81 = scmp.eq.s32.totalorder %s15, 0
      %p82 = por %p80, %p81
      %p83 = scmp.ne.s32.totalorder %s75, %s77
      %p84 = scmp.eq.s32.totalorder %s20, 1
      %p85 = por %p83, %p84
      %p86 = scmp.ne.s32.totalorder %s77, %s78
      %p87 = scmp.eq.s32.totalorder %s20, 0
      %p88 = por %p86, %p87
      %p89 = scmp.ne.s32.totalorder %s77, %s78
      %p90 = scmp.eq.s32.totalorder %s21, 1
      %p91 = por %p89, %p90
      %p93 = scmp.ne.s32.totalorder %s78, %s92
      %p94 = scmp.eq.s32.totalorder %s21, 0
      %p95 = por %p93, %p94
      %s96 = ssub.s32 %s15, %s22
      %p97 = scmp.eq.s32.totalorder %s96, 0
      %s99 = sadd.s32 %s98, 1
      %s100 = scalar_select %p97, %s98, %s99
      %p103 = pneg %p97
      %p104 = scmp.eq.s32.totalorder %s15, 1
      %p105 = por %p103, %p104
      %p106 = scmp.ne.s32.totalorder %s98, %s101
      %p107 = scmp.eq.s32.totalorder %s15, 0
      %p108 = por %p106, %p107
      %p109 = scmp.ne.s32.totalorder %s98, %s101
      %p110 = scmp.eq.s32.totalorder %s20, 1
      %p111 = por %p109, %p110
      %p112 = scmp.ne.s32.totalorder %s101, %s102
      %p113 = scmp.eq.s32.totalorder %s20, 0
      %p114 = por %p112, %p113
      %p115 = scmp.ne.s32.totalorder %s101, %s102
      %p116 = scmp.eq.s32.totalorder %s21, 1
      %p117 = por %p115, %p116
      %p119 = scmp.ne.s32.totalorder %s102, %s118
      %p120 = scmp.eq.s32.totalorder %s21, 0
      %p121 = por %p119, %p120
      %s122 = ssub.s32 %s15, %s22
      %p123 = scmp.eq.s32.totalorder %s122, 0
      %s125 = sadd.s32 %s124, 1
      %s126 = scalar_select %p123, %s124, %s125
      %p129 = pneg %p123
      %p130 = scmp.eq.s32.totalorder %s15, 1
      %p131 = por %p129, %p130
      %p132 = scmp.ne.s32.totalorder %s124, %s127
      %p133 = scmp.eq.s32.totalorder %s15, 0
      %p134 = por %p132, %p133
      %p135 = scmp.ne.s32.totalorder %s124, %s127
      %p136 = scmp.eq.s32.totalorder %s20, 1
      %p137 = por %p135, %p136
      %p138 = scmp.ne.s32.totalorder %s127, %s128
      %p139 = scmp.eq.s32.totalorder %s20, 0
      %p140 = por %p138, %p139
      %p141 = scmp.ne.s32.totalorder %s127, %s128
      %p142 = scmp.eq.s32.totalorder %s21, 1
      %p143 = por %p141, %p142
      %p145 = scmp.ne.s32.totalorder %s128, %s144
      %p146 = scmp.eq.s32.totalorder %s21, 0
      %p147 = por %p145, %p146
      %p148 = scmp.le.s32.totalorder 1, %s15
      %p149 = scmp.lt.s32.totalorder %s15, 3
      %p150 = pnand %p148, %p149
      %p151 = pneg %p150
      // Predicated region
      $region9: #{tpu_custom_call.1} parent=5 // pred_check
        _
      $region10: #{tpu_custom_call.1} parent=5 // pred_check_branch
        %153 = sbr.rel (%p150) target = $region12
      $region11: #{tpu_custom_call.1} parent=5 // pred_region
        %s154 = ssub.s32 %s15, 1
        // Predicated region
        $region13: #{tpu_custom_call.1} parent=11 // pred_check
          %p155 = pneg %p88
        $region14: #{tpu_custom_call.1} parent=11 // pred_check_branch
          %157 = sbr.rel (%p155) target = $region16
        $region15: #{tpu_custom_call.1} parent=11 // pred_region
          %159 = vsyncadd [#allocation4], 0
          %s161 = sshll.u32 %s2, 4
          %s162 = int_to_ptr.vmem [resolvable:$true] %s161
          %164 = dma.vmem_to_smem %s162, 16, [#allocation2], [#allocation4]
        $region16: #{tpu_custom_call.1} parent=11 // pred_fallthru
          _
      $region12: #{tpu_custom_call.1} parent=5 // pred_fallthru
        _
      %p165 = scmp.lt.s32.totalorder %s15, 2
      // Predicated region
      $region17: #{tpu_custom_call.1} parent=5 // pred_check
        %p166 = pneg %p165
      $region18: #{tpu_custom_call.1} parent=5 // pred_check_branch
        %168 = sbr.rel (%p166) target = $region20
      $region19: #{tpu_custom_call.1} parent=5 // pred_region
        // Predicated region
        $region21: #{tpu_custom_call.1} parent=19 // pred_check
          %p169 = pneg %p35
        $region22: #{tpu_custom_call.1} parent=19 // pred_check_branch
          %171 = sbr.rel (%p169) target = $region24
        $region23: #{tpu_custom_call.1} parent=19 // pred_region
          %p172 = scmp.lt.s32.totalorder %s15, 1
          %s173 = scalar_select %p172, %s15, 1
          %s174 = smul.addr %s173, 8
          %s175 = scalar_lea.vmem %s0, %s174
        $region24: #{tpu_custom_call.1} parent=19 // pred_fallthru
          _
        // Predicated region
        $region25: #{tpu_custom_call.1} parent=19 // pred_check
          %p176 = pneg %p61
        $region26: #{tpu_custom_call.1} parent=19 // pred_check_branch
          %178 = sbr.rel (%p176) target = $region28
        $region27: #{tpu_custom_call.1} parent=19 // pred_region
          %p179 = scmp.lt.s32.totalorder %s15, 1
          %s180 = scalar_select %p179, %s15, 1
          %s181 = smul.addr %s180, 8
          %s182 = scalar_lea.vmem %s1, %s181
        $region28: #{tpu_custom_call.1} parent=19 // pred_fallthru
          _
      $region20: #{tpu_custom_call.1} parent=5 // pred_fallthru
        _
      %p183 = scmp.le.s32.totalorder 1, %s15
      %p184 = scmp.lt.s32.totalorder %s15, 3
      %p185 = pnand %p183, %p184
      %p186 = pneg %p185
      // Predicated region
      $region29: #{tpu_custom_call.1} parent=5 // pred_check
        _
      $region30: #{tpu_custom_call.1} parent=5 // pred_check_branch
        %188 = sbr.rel (%p185) target = $region32
      $region31: #{tpu_custom_call.1} parent=5 // pred_region
        %s189 = ssub.s32 %s15, 1
        // Predicated region
        $region33: #{tpu_custom_call.1} parent=31 // pred_check
          %p190 = pneg %p88
        $region34: #{tpu_custom_call.1} parent=31 // pred_check_branch
          %192 = sbr.rel (%p190) target = $region36
        $region35: #{tpu_custom_call.1} parent=31 // pred_region
          %194 = dma.done [#allocation4], 16
        $region36: #{tpu_custom_call.1} parent=31 // pred_fallthru
          _
        %195 = sfence
        %p196 = scmp.lt.s32.totalorder %s20, 1
        %s197 = scalar_select %p196, %s20, 1
        %s198 = smul.addr %s197, 8
        %s199 = scalar_lea.vmem %s0, %s198
        %p200 = pneg %p41
        %p201 = pneg %p38
        %p202 = scmp.lt.s32.totalorder %s20, 1
        %s203 = scalar_select %p202, %s20, 1
        %s204 = smul.addr %s203, 8
        %s205 = scalar_lea.vmem %s1, %s204
        %p206 = pneg %p67
        %p207 = pneg %p64
        %p208 = pneg %p88
        %p209 = pneg %p85
        %p210 = pneg %p114
        %p211 = pneg %p111
        %s212 = sand.u32 %s101, 1
        %s213 = scalar_lea.sflag [#allocation3], %s212
        %s214 = sand.u32 %s101, 1
        %s215 = smul.addr %s214, 8
        %s216 = scalar_lea.vmem [#allocation5], %s215
        %p217 = pneg %p140
        %p218 = pneg %p137
        %p219 = scmp.lt.s32.totalorder %s20, 1
        %s220 = scalar_select %p219, %s20, 1
        %s221 = smul.addr %s220, 8
        %s222 = scalar_lea.vmem %s4, %s221
        %p223 = scmp.lt.s32.totalorder %s20, 1
        %s224 = scalar_select %p223, %s20, 1
        %s225 = smul.addr %s224, 8
        %s226 = scalar_lea.vmem %s0, %s225
        %p227 = scmp.lt.s32.totalorder %s20, 1
        %s228 = scalar_select %p227, %s20, 1
        %s229 = smul.addr %s228, 8
        %s230 = scalar_lea.vmem %s1, %s229
        %p231 = scmp.lt.s32.totalorder %s20, 1
        %s232 = scalar_select %p231, %s20, 1
        %s233 = smul.addr %s232, 8
        %s234 = scalar_lea.vmem %s4, %s233
        %v235 = vld [vmem:[%s226] sm:$0xff]
        %v236 = vld [vmem:[%s230] sm:$0xff]
        %s237 = sld [smem:[#allocation2]]
        %s238 = sld [smem:[#allocation2 + $0x1]]
        %s239 = sld [smem:[#allocation2 + $0x2]]
        %s240 = sld [smem:[#allocation2 + $0x3]]
        %s241 = sld [smem:[#allocation2 + $0x4]]
        %s242 = sld [smem:[#allocation2 + $0x5]]
        %243 = vadd.xlane.f32.xlu0 %v235
        %v244 = vpop.xlane.xlu0 %243
        %v245 = vmul.f32 %v235, %v235
        %246 = vadd.xlane.f32.xlu0 %v245
        %v247 = vpop.xlane.xlu0 %246
        %v248 = vrsqrt.pop %v247
        %v249 = vmul.f32 %v248, %v247
        %v250 = vmul.f32 %v249, %v248
        %v251 = vmul.f32 0.5, %v250
        %v252 = vsub.f32 1.5, %v251
        %v253 = vmul.f32 %v248, %v252
        %v254 = vmul.f32 %v247, %v253
        %vm255 = vcmp.eq.f32.partialorder %v247, inf
        %v256 = vsel %vm255, %v247, %v254
        %vm257 = vcmp.eq.f32.partialorder %v247, 0.0
        %v258 = vand.u32 %v247, 2147483648
        %v259 = vsel %vm257, %v258, %v256
        %v260 = vmax.f32 %v247, 1e-24
        %v261 = vrsqrt.pop %v260
        %v262 = vmul.f32 %v261, %v260
        %v263 = vmul.f32 %v262, %v261
        %v264 = vmul.f32 0.5, %v263
        %v265 = vsub.f32 1.5, %v264
        %v266 = vmul.f32 %v261, %v265
        %vm267 = vweird.f32 %v260
        %vm268 = vweird.f32 %v261
        %vm269 = vmor %vm267, %vm268
        %v270 = vsel %vm269, %v261, %v266
        %v271 = vmul.f32 %v235, %v270
        %272 = vst [vmem:[%s216] sm:$0xff] %v271
        %v273 = vrcp.pop %v236
        %v274 = vmul.f32 %v236, %v273
        %v275 = vsub.f32 1.0, %v274
        %v276 = vmul.f32 %v273, %v275
        %v277 = vadd.f32 %v273, %v276
        %vm278 = vweird.f32 %v236
        %vm279 = vweird.f32 %v273
        %vm280 = vmor %vm278, %vm279
        %v281 = vsel %vm280, %v273, %v277
        %v282 = vand.u32 2147483647, %v236
        %vm283 = vcmp.eq.f32.partialorder %v282, 8.507059e+37
        %v284 = vand.u32 %v236, 2147483648
        %v285 = vor.u32 1.1754944e-38, %v284
        %v286 = vsel %vm283, %v285, %v281
        %v287 = vmul.f32 1.0, %v286
        %v288 = vmul.f32 %v236, %v244
        %v289 = vsub.f32 %v288, %v247
        %291 = vrot.lane.b32.xlu0 %v287, 127
        %v292 = vpop.permute.xlu0 %291
        %v294 = vmul.f32 %v289, %v292
        %v295 = vmul.f32 %v236, 32.0
        %v296 = vmul.f32 %v295, %v236
        %v297 = vmul.f32 %v236, 2.0
        %v298 = vmul.f32 %v297, %v244
        %v299 = vsub.f32 %v296, %v298
        %v300 = vadd.f32 %v299, %v247
        %v301 = vmul.f32 %v287, %v287
        %303 = vrot.lane.b32.xlu0 %v301, 127
        %v304 = vpop.permute.xlu0 %303
        %v306 = vmul.f32 %v300, %v304
        %v307 = vmax.f32 %v306, 0.0
        %v308 = vrsqrt.pop %v307
        %v309 = vmul.f32 %v308, %v307
        %v310 = vmul.f32 %v309, %v308
        %v311 = vmul.f32 0.5, %v310
        %v312 = vsub.f32 1.5, %v311
        %v313 = vmul.f32 %v308, %v312
        %v314 = vmul.f32 %v307, %v313
        %vm315 = vcmp.eq.f32.partialorder %v307, inf
        %v316 = vsel %vm315, %v307, %v314
        %vm317 = vcmp.eq.f32.partialorder %v307, 0.0
        %v318 = vand.u32 %v307, 2147483648
        %v319 = vsel %vm317, %v318, %v316
        %v320 = vmul.f32 %v259, %v319
        %v321 = vmax.f32 %v320, 1e-08
        %v322 = vrcp.pop %v321
        %v323 = vmul.f32 %v321, %v322
        %v324 = vsub.f32 1.0, %v323
        %v325 = vmul.f32 %v322, %v324
        %v326 = vadd.f32 %v322, %v325
        %vm327 = vweird.f32 %v321
        %vm328 = vweird.f32 %v322
        %vm329 = vmor %vm327, %vm328
        %v330 = vsel %vm329, %v322, %v326
        %v331 = vand.u32 2147483647, %v321
        %vm332 = vcmp.eq.f32.partialorder %v331, 8.507059e+37
        %v333 = vand.u32 %v321, 2147483648
        %v334 = vor.u32 1.1754944e-38, %v333
        %v335 = vsel %vm332, %v334, %v330
        %v336 = vmul.f32 %v294, %v335
        %v337 = vstv %s237
        %v338 = vmul.f32 %v337, %v336
        %v339 = vstv %s238
        %v340 = vadd.f32 %v338, %v339
        %v341 = vmul.f32 %v259, 5.656854
        %v342 = vmax.f32 %v341, 1e-08
        %v343 = vrcp.pop %v342
        %v344 = vmul.f32 %v342, %v343
        %v345 = vsub.f32 1.0, %v344
        %v346 = vmul.f32 %v343, %v345
        %v347 = vadd.f32 %v343, %v346
        %vm348 = vweird.f32 %v342
        %vm349 = vweird.f32 %v343
        %vm350 = vmor %vm348, %vm349
        %v351 = vsel %vm350, %v343, %v347
        %v352 = vand.u32 2147483647, %v342
        %vm353 = vcmp.eq.f32.partialorder %v352, 8.507059e+37
        %v354 = vand.u32 %v342, 2147483648
        %v355 = vor.u32 1.1754944e-38, %v354
        %v356 = vsel %vm353, %v355, %v351
        %v357 = vmul.f32 %v244, %v356
        %v358 = vmul.f32 %v337, %v357
        %v359 = vadd.f32 %v358, %v339
        %v360 = vmul.f32 %v359, 1.442695
        %v361 = vpow.pop %v360
        %s362 = ssub.f32 0.0, %s237
        %v363 = vstv %s362
        %v364 = vmul.f32 %v363, %v357
        %v365 = vadd.f32 %v364, %v339
        %v366 = vmul.f32 %v365, 1.442695
        %v367 = vpow.pop %v366
        %v368 = vstv %s239
        %v369 = vmul.f32 %v368, %v361
        %v370 = vstv %s240
        %v371 = vmul.f32 %v370, %v367
        %v372 = vadd.f32 %v369, %v371
        %s373 = smul.f32 %s241, %s242
        %v374 = vstv %s373
        %v375 = vadd.f32 %v372, %v374
        %vm376 = vcmp.gt.f32.partialorder %v236, 0.0
        %vm377 = vcmp.lt.f32.partialorder %v236, 0.0
        %v378 = vstv %s242
        %v379 = vsel %vm377, %v367, %v378
        %v380 = vsel %vm376, %v361, %v379
        %v381 = vsub.f32 %v375, %v380
        %v382 = vmul.f32 %v340, 1.442695
        %v383 = vpow.pop %v382
        %385 = vrot.lane.b32.xlu0 %v383, 3
        %v386 = vpop.permute.xlu0 %385
        %v388 = vadd.f32 %v381, %v386
        %v389 = vsub.f32 0.0, %v340
        %v390 = vlog2.pop %v388
        %v391 = vmul.f32 %v390, 0.6931472
        %393 = vrot.lane.b32.xlu0 %v391, 125
        %v394 = vpop.permute.xlu0 %393
        %v396 = vadd.f32 %v389, %v394
        %398 = vrot.lane.b32.xlu0 %v236, 126
        %v399 = vpop.permute.xlu0 %398
        %v401 = vmul.f32 %v396, %v399
        %vm402 = vcmask 7168
        %403 = vst.msk [vmem:[%s234] sm:$0xff] %vm402, %v401
        %s404 = sand.u32 %s101, 1
        %s405 = scalar_lea.sflag [#allocation3], %s404
        %s406 = sand.u32 %s101, 1
        %s407 = smul.addr %s406, 8
        %s408 = scalar_lea.vmem [#allocation5], %s407
        %p409 = scmp.lt.s32.totalorder %s20, 1
        %s410 = scalar_select %p409, %s20, 1
        %s411 = smul.addr %s410, 8
        %s412 = scalar_lea.vmem %s4, %s411
        // Predicated region
        $region37: #{tpu_custom_call.1} parent=31 // pred_check
          %p413 = pneg %p111
        $region38: #{tpu_custom_call.1} parent=31 // pred_check_branch
          %415 = sbr.rel (%p413) target = $region40
        $region39: #{tpu_custom_call.1} parent=31 // pred_region
          %417 = vsyncadd %s405, 0
          %s418 = smul.addr %s20, 8
          %s419 = scalar_lea.hbm %s3, %s418
          %s421 = sshll.u32 %s408, 4
          %s422 = int_to_ptr.vmem [resolvable:$true] %s421
          %s423 = sshll.u32 %s419, 4
          %s424 = int_to_ptr.hbm [resolvable:$true] %s423
          %426 = dma.vmem_to_hbm [thread:$0]  %s422, 128, %s424, %s405
        $region40: #{tpu_custom_call.1} parent=31 // pred_fallthru
          _
        // Predicated region
        $region41: #{tpu_custom_call.1} parent=31 // pred_check
          %p427 = pneg %p137
        $region42: #{tpu_custom_call.1} parent=31 // pred_check_branch
          %429 = sbr.rel (%p427) target = $region44
        $region43: #{tpu_custom_call.1} parent=31 // pred_region
          _
        $region44: #{tpu_custom_call.1} parent=31 // pred_fallthru
          _
      $region32: #{tpu_custom_call.1} parent=5 // pred_fallthru
        _
      %p430 = scmp.le.s32.totalorder 2, %s15
      // Predicated region
      $region45: #{tpu_custom_call.1} parent=5 // pred_check
        %p431 = pneg %p430
      $region46: #{tpu_custom_call.1} parent=5 // pred_check_branch
        %433 = sbr.rel (%p431) target = $region48
      $region47: #{tpu_custom_call.1} parent=5 // pred_region
        %s434 = ssub.s32 %s15, 2
        // Predicated region
        $region49: #{tpu_custom_call.1} parent=47 // pred_check
          %p435 = pneg %p117
        $region50: #{tpu_custom_call.1} parent=47 // pred_check_branch
          %437 = sbr.rel (%p435) target = $region52
        $region51: #{tpu_custom_call.1} parent=47 // pred_region
          %s438 = sand.u32 %s102, 1
          %s439 = scalar_lea.sflag [#allocation3], %s438
          %s440 = sand.u32 %s102, 1
          %s441 = smul.addr %s440, 8
          %s442 = scalar_lea.vmem [#allocation5], %s441
          %444 = dma.done %s439, 128
        $region52: #{tpu_custom_call.1} parent=47 // pred_fallthru
          _
        // Predicated region
        $region53: #{tpu_custom_call.1} parent=47 // pred_check
          %p445 = pneg %p143
        $region54: #{tpu_custom_call.1} parent=47 // pred_check_branch
          %447 = sbr.rel (%p445) target = $region56
        $region55: #{tpu_custom_call.1} parent=47 // pred_region
          %p448 = scmp.lt.s32.totalorder %s21, 1
          %s449 = scalar_select %p448, %s21, 1
          %s450 = smul.addr %s449, 8
          %s451 = scalar_lea.vmem %s4, %s450
        $region56: #{tpu_custom_call.1} parent=47 // pred_fallthru
          _
      $region48: #{tpu_custom_call.1} parent=5 // pred_fallthru
        _
    $region6: #{tpu_custom_call.1} parent=1 // loop_footer
      %s19 = sadd.s32 1, %s15
    $region7: #{tpu_custom_call.1} parent=1 // loop_footer_branch
      %14 = sbr.rel target = $region3
    $region8: #{tpu_custom_call.1} parent=1 // loop_exit
      _
    %452 = vsyncpa [#allocation3], 1
    %s453 = scalar_lea.sflag [#allocation3], 1
    %454 = vsyncpa %s453, 1
    %455 = vsyncpa [#allocation4], 1
    %s456 = scalar_lea.sflag [#allocation4], 1
    %457 = vsyncpa %s456, 1

</llo_original>
